<compile_context>
chip_gen: v7x
topology: tpu7x:2x2x1
jax: 0.10.0
libtpu: 0.0.40
codegen_flags: <defaults>
</compile_context>

<pallas_src>
from functools import partial

import jax
import jax.numpy as jnp
from jax.experimental import pallas as pl
from jax.experimental.pallas import tpu as pltpu

EPS = 1e-5


# ---------------------------------------------------------------------------
# Kernels
# ---------------------------------------------------------------------------
def _fused_resident_kernel(x_ref, gamma_ref, beta_ref, wbd_ref, b_ref, o_ref):
    # Whole problem VMEM-resident: 1 HBM read of x, 1 HBM write of out.
    # x_ref: (B, F); gamma/beta/b: (1, F); wbd: (F, F) block-diagonal kron(I_P, w.T).
    x = x_ref[...]
    mean = jnp.mean(x, axis=0, keepdims=True)                 # (1, F), training-mode stats
    var = jnp.mean((x - mean) ** 2, axis=0, keepdims=True)    # biased (ddof=0), stable two-pass
    scale = gamma_ref[...] * jax.lax.rsqrt(var + EPS)         # (1, F)
    shift = beta_ref[...] - mean * scale                      # (1, F)
    xn = x * scale + shift                                    # fused BN affine (resident, free)
    y = jnp.dot(xn, wbd_ref[...], preferred_element_type=jnp.float32) + b_ref[...]
    o_ref[...] = jnp.maximum(y, 0.0).astype(o_ref.dtype)


def _tiled_matmul_kernel(x_ref, w_ref, b_ref, o_ref):
    # BN affine already folded into w/b by the wrapper: o = relu(x @ W' + b').
    # Single MXU push, lane-dense (F-wide) unmasked store.
    y = jnp.dot(x_ref[...], w_ref[...], preferred_element_type=jnp.float32) + b_ref[...]
    o_ref[...] = jnp.maximum(y, 0.0).astype(o_ref.dtype)


# ---------------------------------------------------------------------------
# Tiling heuristics
# ---------------------------------------------------------------------------
def _choose_batch_tiling(B, F):
    """Pick (tile_rows, n_steps, padded_B) for the batch-tiled path."""
    def r8(n):
        return max(8, ((n + 7) // 8) * 8)

    # Target 512-1024 row tiles (HBM roofline), but guarantee >= 2 grid steps
    # for mid/large batches so the axis shards across v7x's two TensorCores.
    if B <= 256:
        tb = r8(B)
    elif B <= 1024:
        tb = r8(pl.cdiv(B, 2))
    else:
        tb = 512

    # Keep double-buffered x/out tiles + (possibly double-buffered) weight
    # within ~24 MiB of VMEM.
    budget = 24 * 1024 * 1024
    while tb > 8 and (4 * tb * F * 4 + 2 * F * F * 4) > budget:
        tb = r8(tb // 2)

    n_steps = pl.cdiv(B, tb)
    tb = r8(pl.cdiv(B, n_steps))   # rebalance: padding < 8 rows per grid step
    return tb, n_steps, n_steps * tb


# ---------------------------------------------------------------------------
# Forward wrapper
# ---------------------------------------------------------------------------
@partial(jax.jit, static_argnames=("n_partitions", "force_tiled"))
def true_transformer_forward(x, gamma, beta, w, b, *, n_partitions, force_tiled=False):
    B, F = x.shape
    D = F // n_partitions
    x = x.astype(jnp.float32)
    gamma = gamma.astype(jnp.float32).reshape(1, F)
    beta = beta.astype(jnp.float32).reshape(1, F)

    # Block-diagonal weight kron(I_P, w.T) and per-partition-tiled bias.
    # (Cheap at F=128; constant-folded / hoistable if params are reused.)
    w_bd = jnp.kron(jnp.eye(n_partitions, dtype=jnp.float32),
                    w.T.astype(jnp.float32))                     # (F, F)
    b_tiled = jnp.tile(b.astype(jnp.float32).reshape(1, D),
                       (1, n_partitions))                        # (1, F)

    x_bytes = B * F * 4
    w_bytes = F * F * 4
    resident_ok = (not force_tiled) and (4 * x_bytes + 4 * w_bytes <= 24 * 1024 * 1024)

    if resident_ok:
        # ---- Path A: single fused kernel, x VMEM-resident (1 read + 1 write). ----
        vmem_a = int(min(max(4 * x_bytes + 4 * w_bytes + (2 << 20), 16 << 20), 56 << 20))
        return pl.pallas_call(
            _fused_resident_kernel,
            out_shape=jax.ShapeDtypeStruct((B, F), jnp.float32),
            grid_spec=pltpu.PrefetchScalarGridSpec(
                num_scalar_prefetch=0,
                grid=(1,),
                in_specs=[
                    pl.BlockSpec((B, F), lambda i: (0, 0)),   # x (whole array)
                    pl.BlockSpec((1, F), lambda i: (0, 0)),   # gamma
                    pl.BlockSpec((1, F), lambda i: (0, 0)),   # beta
                    pl.BlockSpec((F, F), lambda i: (0, 0)),   # block-diag weight
                    pl.BlockSpec((1, F), lambda i: (0, 0)),   # tiled bias
                ],
                out_specs=pl.BlockSpec((B, F), lambda i: (0, 0)),
            ),
            compiler_params=pltpu.CompilerParams(
                dimension_semantics=("arbitrary",),
                vmem_limit_bytes=vmem_a,
            ),
        )(x, gamma, beta, w_bd, b_tiled)

    # ---- Path B: batch-tiled. One-pass batch stats (mean & mean-of-squares
    #      fuse into a single XLA pass over x), BN affine folded into W'/b'. ----
    m1 = jnp.mean(x, axis=0, keepdims=True)                      # (1, F)
    m2 = jnp.mean(x * x, axis=0, keepdims=True)                  # (1, F)
    var = jnp.maximum(m2 - m1 * m1, 0.0)                         # guard cancellation negatives
    scale = gamma * jax.lax.rsqrt(var + EPS)                     # (1, F)
    shift = beta - m1 * scale                                    # (1, F)
    w_fold = scale.reshape(F, 1) * w_bd                          # fold BN scale into rows of W
    b_fold = shift @ w_bd + b_tiled                              # (1, F)

    tb, n_steps, Bp = _choose_batch_tiling(B, F)
    if Bp != B:
        x = jnp.pad(x, ((0, Bp - B), (0, 0)))                    # pad rows sliced off below

    # Grid-invariant weight: single-buffer it once it is large (v7x: 64 MiB VMEM).
    single_buffer_w = (2 * w_bytes) > (4 * 1024 * 1024)
    if single_buffer_w:
        w_spec = pl.BlockSpec((F, F), lambda i: (0, 0), pipeline_mode=pl.Buffered(1))
        w_bufs = 1
    else:
        w_spec = pl.BlockSpec((F, F), lambda i: (0, 0))
        w_bufs = 2

    footprint = 4 * tb * F * 4 + w_bufs * w_bytes + 4 * F * 4
    vmem_b = int(min(max(2 * footprint, 16 << 20), 56 << 20))

    out = pl.pallas_call(
        _tiled_matmul_kernel,
        out_shape=jax.ShapeDtypeStruct((Bp, F), jnp.float32),
        grid_spec=pltpu.PrefetchScalarGridSpec(
            num_scalar_prefetch=0,
            grid=(n_steps,),
            in_specs=[
                pl.BlockSpec((tb, F), lambda i: (i, 0)),   # x tile (pipelined over batch)
                w_spec,                                    # folded weight W'
                pl.BlockSpec((1, F), lambda i: (0, 0)),    # folded bias b'
            ],
            out_specs=pl.BlockSpec((tb, F), lambda i: (i, 0)),
        ),
        compiler_params=pltpu.CompilerParams(
            dimension_semantics=("parallel",),
            vmem_limit_bytes=vmem_b,
        ),
    )(x, w_fold, b_fold)

    return out[:B] if Bp != B else out


# ---------------------------------------------------------------------------
# Pure-JAX reference (matches the PyTorch module forward in training mode)
# ---------------------------------------------------------------------------
def reference_forward(x, gamma, beta, w, b, *, n_partitions):
    B, F = x.shape
    D = F // n_partitions
    mean = jnp.mean(x, axis=0, keepdims=True)
    var = jnp.mean((x - mean) ** 2, axis=0, keepdims=True)       # biased, training mode
    xn = (x - mean) / jnp.sqrt(var + EPS) * gamma + beta
    out = xn.reshape(B, n_partitions, D)
    out = jnp.maximum(out @ w.T + b, 0.0)
    return out.reshape(B, F)


if __name__ == "__main__":
    # Shapes consistent with the module: in_size = 128, n_partitions = 4 -> int_dim = 32.
    n_partitions = 4
    int_dim = 32
    in_size = n_partitions * int_dim

    key = jax.random.PRNGKey(0)
    kx1, kg, kb, kw, kbb, kx2 = jax.random.split(key, 6)

    gamma = 1.0 + 0.1 * jax.random.normal(kg, (in_size,), dtype=jnp.float32)
    beta = 0.1 * jax.random.normal(kb, (in_size,), dtype=jnp.float32)
    w = jax.random.normal(kw, (int_dim, int_dim), dtype=jnp.float32) * (1.0 / jnp.sqrt(int_dim))
    b = 0.1 * jax.random.normal(kbb, (int_dim,), dtype=jnp.float32)

    # Path A: small batch -> fully VMEM-resident fused kernel (1 read + 1 write).
    B1 = 8
    x1 = jax.random.normal(kx1, (B1, in_size), dtype=jnp.float32)
    out1 = jax.block_until_ready(
        true_transformer_forward(x1, gamma, beta, w, b, n_partitions=n_partitions))
    ref1 = reference_forward(x1, gamma, beta, w, b, n_partitions=n_partitions)
    assert out1.shape == (B1, in_size)
    assert jnp.allclose(out1, ref1, atol=1e-4, rtol=1e-4), "Path A mismatch vs reference"

    # Path B (forced): batch-tiled path, exercises folded W'/b', multi-step grid,
    # ragged batch padding and the slice-off.
    B2 = 330
    x2 = jax.random.normal(kx2, (B2, in_size), dtype=jnp.float32)
    out2 = jax.block_until_ready(
        true_transformer_forward(x2, gamma, beta, w, b,
                                 n_partitions=n_partitions, force_tiled=True))
    ref2 = reference_forward(x2, gamma, beta, w, b, n_partitions=n_partitions)
    assert out2.shape == (B2, in_size)
    assert jnp.allclose(out2, ref2, atol=1e-4, rtol=1e-4), "Path B mismatch vs reference"

    print("KERNEL_OK")
</pallas_src>

<mosaic_0001>
module attributes {stable_mosaic.version = 11 : i64} {
  func.func @_fused_resident_kernel(%arg0: i32, %arg1: memref<8x128xf32, #tpu.memory_space<vmem>>, %arg2: memref<1x128xf32, #tpu.memory_space<vmem>>, %arg3: memref<1x128xf32, #tpu.memory_space<vmem>>, %arg4: memref<128x128xf32, #tpu.memory_space<vmem>>, %arg5: memref<1x128xf32, #tpu.memory_space<vmem>>, %arg6: memref<8x128xf32, #tpu.memory_space<vmem>>) attributes {dimension_semantics = [#tpu.dimension_semantics<arbitrary>], iteration_bounds = array<i64: 1>, scalar_prefetch = 0 : i64, scratch_operands = 0 : i64, tpu.core_type = #tpu.core_type<tc>, window_params = [{pipeline_mode = #tpu.pipeline_mode<synchronous>, transform_indices = @transform_0, window_bounds = array<i64: 8, 128>}, {pipeline_mode = #tpu.pipeline_mode<synchronous>, transform_indices = @transform_1, window_bounds = array<i64: 1, 128>}, {pipeline_mode = #tpu.pipeline_mode<synchronous>, transform_indices = @transform_2, window_bounds = array<i64: 1, 128>}, {pipeline_mode = #tpu.pipeline_mode<synchronous>, transform_indices = @transform_3, window_bounds = array<i64: 128, 128>}, {pipeline_mode = #tpu.pipeline_mode<synchronous>, transform_indices = @transform_4, window_bounds = array<i64: 1, 128>}, {pipeline_mode = #tpu.pipeline_mode<synchronous>, transform_indices = @transform_5, window_bounds = array<i64: 8, 128>}]} {
    %c0 = arith.constant 0 : index
    %c0_0 = arith.constant 0 : index
    %0 = vector.load %arg1[%c0, %c0_0] : memref<8x128xf32, #tpu.memory_space<vmem>>, vector<8x128xf32>
    %cst = arith.constant dense<0.000000e+00> : vector<128xf32>
    %1 = vector.multi_reduction <add>, %0, %cst [0] : vector<8x128xf32> to vector<128xf32>
    %2 = vector.shape_cast %1 : vector<128xf32> to vector<1x128xf32>
    %cst_1 = arith.constant 8.000000e+00 : f32
    %3 = vector.broadcast %cst_1 : f32 to vector<1x128xf32>
    %4 = arith.divf %2, %3 : vector<1x128xf32>
    %5 = vector.broadcast %4 : vector<1x128xf32> to vector<8x128xf32>
    %6 = arith.subf %0, %5 : vector<8x128xf32>
    %7 = arith.mulf %6, %6 : vector<8x128xf32>
    %cst_2 = arith.constant dense<0.000000e+00> : vector<128xf32>
    %8 = vector.multi_reduction <add>, %7, %cst_2 [0] : vector<8x128xf32> to vector<128xf32>
    %9 = vector.shape_cast %8 : vector<128xf32> to vector<1x128xf32>
    %cst_3 = arith.constant 8.000000e+00 : f32
    %10 = vector.broadcast %cst_3 : f32 to vector<1x128xf32>
    %11 = arith.divf %9, %10 : vector<1x128xf32>
    %c0_4 = arith.constant 0 : index
    %c0_5 = arith.constant 0 : index
    %12 = vector.load %arg2[%c0_4, %c0_5] : memref<1x128xf32, #tpu.memory_space<vmem>>, vector<1x128xf32>
    %cst_6 = arith.constant 9.99999974E-6 : f32
    %13 = vector.broadcast %cst_6 : f32 to vector<1x128xf32>
    %14 = arith.addf %11, %13 : vector<1x128xf32>
    %15 = math.rsqrt %14 : vector<1x128xf32>
    %16 = arith.mulf %12, %15 : vector<1x128xf32>
    %c0_7 = arith.constant 0 : index
    %c0_8 = arith.constant 0 : index
    %17 = vector.load %arg3[%c0_7, %c0_8] : memref<1x128xf32, #tpu.memory_space<vmem>>, vector<1x128xf32>
    %18 = arith.mulf %4, %16 : vector<1x128xf32>
    %19 = arith.subf %17, %18 : vector<1x128xf32>
    %20 = vector.broadcast %16 : vector<1x128xf32> to vector<8x128xf32>
    %21 = arith.mulf %0, %20 : vector<8x128xf32>
    %22 = vector.broadcast %19 : vector<1x128xf32> to vector<8x128xf32>
    %23 = arith.addf %21, %22 : vector<8x128xf32>
    %c0_9 = arith.constant 0 : index
    %c0_10 = arith.constant 0 : index
    %24 = vector.load %arg4[%c0_9, %c0_10] : memref<128x128xf32, #tpu.memory_space<vmem>>, vector<128x128xf32>
    %cst_11 = arith.constant dense<0.000000e+00> : vector<8x128xf32>
    %25 = tpu.matmul %23, %24, %cst_11 {dimension_numbers = #tpu.dot_dimension_numbers<[1], [0], [0], [1], [0, 0, 1, 1], [], []>} : vector<8x128xf32>, vector<128x128xf32>, vector<8x128xf32> -> vector<8x128xf32>
    %c0_12 = arith.constant 0 : index
    %c0_13 = arith.constant 0 : index
    %26 = vector.load %arg5[%c0_12, %c0_13] : memref<1x128xf32, #tpu.memory_space<vmem>>, vector<1x128xf32>
    %27 = vector.broadcast %26 : vector<1x128xf32> to vector<8x128xf32>
    %28 = arith.addf %25, %27 : vector<8x128xf32>
    %cst_14 = arith.constant 0.000000e+00 : f32
    %29 = vector.broadcast %cst_14 : f32 to vector<8x128xf32>
    %30 = arith.maximumf %28, %29 : vector<8x128xf32>
    %c0_15 = arith.constant 0 : index
    %c0_16 = arith.constant 0 : index
    %31 = vector.load %arg6[%c0_15, %c0_16] : memref<8x128xf32, #tpu.memory_space<vmem>>, vector<8x128xf32>
    tpu.vector_store %arg6[%c0_15, %c0_16], %30 {strides = array<i32>} : memref<8x128xf32, #tpu.memory_space<vmem>>, vector<8x128xf32>,
    return
  }
  func.func @transform_0(%arg0: i32) -> (i32, i32) {
    %c0_i32 = arith.constant 0 : i32
    %c0_i32_0 = arith.constant 0 : i32
    %c0_i32_1 = arith.constant 0 : i32
    return %c0_i32, %c0_i32_0 : i32, i32
  }
  func.func @transform_1(%arg0: i32) -> (i32, i32) {
    %c0_i32 = arith.constant 0 : i32
    %c0_i32_0 = arith.constant 0 : i32
    %c0_i32_1 = arith.constant 0 : i32
    return %c0_i32, %c0_i32_0 : i32, i32
  }
  func.func @transform_2(%arg0: i32) -> (i32, i32) {
    %c0_i32 = arith.constant 0 : i32
    %c0_i32_0 = arith.constant 0 : i32
    %c0_i32_1 = arith.constant 0 : i32
    return %c0_i32, %c0_i32_0 : i32, i32
  }
  func.func @transform_3(%arg0: i32) -> (i32, i32) {
    %c0_i32 = arith.constant 0 : i32
    %c0_i32_0 = arith.constant 0 : i32
    %c0_i32_1 = arith.constant 0 : i32
    return %c0_i32, %c0_i32_0 : i32, i32
  }
  func.func @transform_4(%arg0: i32) -> (i32, i32) {
    %c0_i32 = arith.constant 0 : i32
    %c0_i32_0 = arith.constant 0 : i32
    %c0_i32_1 = arith.constant 0 : i32
    return %c0_i32, %c0_i32_0 : i32, i32
  }
  func.func @transform_5(%arg0: i32) -> (i32, i32) {
    %c0_i32 = arith.constant 0 : i32
    %c0_i32_0 = arith.constant 0 : i32
    %c0_i32_1 = arith.constant 0 : i32
    return %c0_i32, %c0_i32_0 : i32, i32
  }
}

</mosaic_0001>

<llo_original>
// kernel: true_transformer_forward.1
$region0: #{true_transformer_forward.1}
  #allocation0 [shape = 'u32[]', space=smem, size = 0x4, offset = 0x4, fixed_abs, tag = 'smem constant byte address 0x4 - core index']
  #allocation1 [shape = 'u32[144,128]{1,0:T(1,128)}', space=vmem, size = 0x12000, scoped, tag = 'internal scratch']
  %s0 = inlined_call_operand.vmem [shape: f32[8,128], index: 0, kind: input, shape index: {}]
  %s1 = inlined_call_operand.vmem [shape: f32[1,128], index: 1, kind: input, shape index: {}]
  %s2 = inlined_call_operand.vmem [shape: f32[1,128], index: 2, kind: input, shape index: {}]
  %s3 = inlined_call_operand.vmem [shape: f32[128,128], index: 3, kind: input, shape index: {}]
  %s4 = inlined_call_operand.vmem [shape: f32[1,128], index: 4, kind: input, shape index: {}]
  %s5 = inlined_call_operand.hbm [shape: f32[8,128], index: 5, kind: output, shape index: {}]
  %s6 = sld [smem:[#allocation0]]
  $region30: #{true_transformer_forward.1} parent=0
    _
  %s8 = ssub.s32 1, %s6
  %s9 = scalar_select 0, %s8, %s6
  $region1: #{true_transformer_forward.1} parent=0
    #allocation2 [shape = 'u8[4096]{0}', space=vmem, size = 0x1000, scoped, tag = 'output window, operand 0, single buffered']
    #allocation3 [shape = 's32[1]{0}', space=sflag, size = 0x4, scoped, tag = 'scoped memory for true_transformer_forward.1']
    %10 = vsyncpa [#allocation3], 0
    // Predicated region
    $region2: #{true_transformer_forward.1} parent=1 // pred_check
      _
    $region3: #{true_transformer_forward.1} parent=1 // pred_check_branch
      %12 = sbr.rel (0) target = $region5
    $region4: #{true_transformer_forward.1} parent=1 // pred_region
      _
    $region5: #{true_transformer_forward.1} parent=1 // pred_fallthru
      _
    // Predicated region
    $region6: #{true_transformer_forward.1} parent=1 // pred_check
      _
    $region7: #{true_transformer_forward.1} parent=1 // pred_check_branch
      %14 = sbr.rel (0) target = $region9
    $region8: #{true_transformer_forward.1} parent=1 // pred_region
      _
    $region9: #{true_transformer_forward.1} parent=1 // pred_fallthru
      _
    // Predicated region
    $region10: #{true_transformer_forward.1} parent=1 // pred_check
      _
    $region11: #{true_transformer_forward.1} parent=1 // pred_check_branch
      %16 = sbr.rel (0) target = $region13
    $region12: #{true_transformer_forward.1} parent=1 // pred_region
      _
    $region13: #{true_transformer_forward.1} parent=1 // pred_fallthru
      _
    // Predicated region
    $region14: #{true_transformer_forward.1} parent=1 // pred_check
      _
    $region15: #{true_transformer_forward.1} parent=1 // pred_check_branch
      %18 = sbr.rel (0) target = $region17
    $region16: #{true_transformer_forward.1} parent=1 // pred_region
      _
    $region17: #{true_transformer_forward.1} parent=1 // pred_fallthru
      _
    // Predicated region
    $region18: #{true_transformer_forward.1} parent=1 // pred_check
      _
    $region19: #{true_transformer_forward.1} parent=1 // pred_check_branch
      %20 = sbr.rel (0) target = $region21
    $region20: #{true_transformer_forward.1} parent=1 // pred_region
      _
    $region21: #{true_transformer_forward.1} parent=1 // pred_fallthru
      _
    %v21 = vld [vmem:[%s0] sm:$0xff]
    %v22 = vrot.slane %v21, 4
    %v23 = vadd.f32 %v21, %v22
    %v24 = vrot.slane %v23, 2
    %v25 = vadd.f32 %v23, %v24
    %v26 = vrot.slane %v25, 1
    %v27 = vadd.f32 %v25, %v26
    %v28 = vrcp.pop 8.0
    %v29 = vmul.f32 %v27, %v28
    %v30 = vsub.f32 %v21, %v29
    %v31 = vmul.f32 %v30, %v30
    %v32 = vrot.slane %v31, 4
    %v33 = vadd.f32 %v31, %v32
    %v34 = vrot.slane %v33, 2
    %v35 = vadd.f32 %v33, %v34
    %v36 = vrot.slane %v35, 1
    %v37 = vadd.f32 %v35, %v36
    %v38 = vmul.f32 %v37, %v28
    %v39 = vld [vmem:[%s1] sm:$0x1]
    %v40 = vadd.f32 %v38, 1e-05
    %v41 = vrsqrt.pop %v40
    %v42 = vmul.f32 %v39, %v41
    %v43 = vld [vmem:[%s2] sm:$0x1]
    %v44 = vmul.f32 %v29, %v42
    %v45 = vsub.f32 %v43, %v44
    %v47 = vlaneseq
    %v48 = vshrl.u32 %v47, 7
    %v49 = vsub.s32 0, %v48
    %v50 = vrot.slane %v42, %v49
    %v52 = vmul.f32 %v21, %v50
    %v54 = vlaneseq
    %v55 = vshrl.u32 %v54, 7
    %v56 = vsub.s32 0, %v55
    %v57 = vrot.slane %v45, %v56
    %v59 = vadd.f32 %v52, %v57
    %v60 = vld [vmem:[%s3] sm:$0xff]
    %v61 = vld [vmem:[%s3 + $0x8] sm:$0xff]
    %v62 = vld [vmem:[%s3 + $0x10] sm:$0xff]
    %v63 = vld [vmem:[%s3 + $0x18] sm:$0xff]
    %v64 = vld [vmem:[%s3 + $0x20] sm:$0xff]
    %v65 = vld [vmem:[%s3 + $0x28] sm:$0xff]
    %v66 = vld [vmem:[%s3 + $0x30] sm:$0xff]
    %v67 = vld [vmem:[%s3 + $0x38] sm:$0xff]
    %v68 = vld [vmem:[%s3 + $0x40] sm:$0xff]
    %v69 = vld [vmem:[%s3 + $0x48] sm:$0xff]
    %v70 = vld [vmem:[%s3 + $0x50] sm:$0xff]
    %v71 = vld [vmem:[%s3 + $0x58] sm:$0xff]
    %v72 = vld [vmem:[%s3 + $0x60] sm:$0xff]
    %v73 = vld [vmem:[%s3 + $0x68] sm:$0xff]
    %v74 = vld [vmem:[%s3 + $0x70] sm:$0xff]
    %v75 = vld [vmem:[%s3 + $0x78] sm:$0xff]
    %v76 = vld [vmem:[%s4] sm:$0x1]
    %v78 = vlaneseq
    %v79 = vshrl.u32 %v78, 7
    %v80 = vsub.s32 0, %v79
    %v81 = vrot.slane %v76, %v80
    %83 = vmatprep.subr.mxu0 0.0
    %84 = vmatpush1.msra.mxu0 %v60
    %85 = vmatprep.subr.mxu0 0.0
    %86 = vmatpush1.msra.mxu0 %v61
    %87 = vmatprep.subr.mxu0 0.0
    %88 = vmatpush1.msra.mxu0 %v62
    %89 = vmatprep.subr.mxu0 0.0
    %90 = vmatpush1.msra.mxu0 %v63
    %91 = vmatprep.subr.mxu0 0.0
    %92 = vmatpush1.msra.mxu0 %v64
    %93 = vmatprep.subr.mxu0 0.0
    %94 = vmatpush1.msra.mxu0 %v65
    %95 = vmatprep.subr.mxu0 0.0
    %96 = vmatpush1.msra.mxu0 %v66
    %97 = vmatprep.subr.mxu0 0.0
    %98 = vmatpush1.msra.mxu0 %v67
    %99 = vmatprep.subr.mxu0 0.0
    %100 = vmatpush1.msra.mxu0 %v68
    %101 = vmatprep.subr.mxu0 0.0
    %102 = vmatpush1.msra.mxu0 %v69
    %103 = vmatprep.subr.mxu0 0.0
    %104 = vmatpush1.msra.mxu0 %v70
    %105 = vmatprep.subr.mxu0 0.0
    %106 = vmatpush1.msra.mxu0 %v71
    %107 = vmatprep.subr.mxu0 0.0
    %108 = vmatpush1.msra.mxu0 %v72
    %109 = vmatprep.subr.mxu0 0.0
    %110 = vmatpush1.msra.mxu0 %v73
    %111 = vmatprep.subr.mxu0 0.0
    %112 = vmatpush1.msra.mxu0 %v74
    %113 = vmatprep.subr.mxu0 0.0
    %114 = vmatpush1.msra.mxu0 %v75
    %115 = vmatprep.subr.mxu0 0.0
    %116 = vmatpush1.msra.mxu0 0.0
    %117 = vmatprep.subr.mxu0 0.0
    %118 = vmatpush1.msra.mxu0 0.0
    %119 = vmatprep.subr.mxu0 0.0
    %120 = vmatpush1.msra.mxu0 0.0
    %121 = vmatprep.subr.mxu0 0.0
    %122 = vmatpush1.msra.mxu0 0.0
    %123 = vmatprep.subr.mxu0 0.0
    %124 = vmatpush1.msra.mxu0 0.0
    %125 = vmatprep.subr.mxu0 0.0
    %126 = vmatpush1.msra.mxu0 0.0
    %127 = vmatprep.subr.mxu0 0.0
    %128 = vmatpush1.msra.mxu0 0.0
    %129 = vmatprep.subr.mxu0 0.0
    %130 = vmatpush1.msra.mxu0 0.0
    %131 = vmatprep.subr.mxu0 0.0
    %132 = vmatpush1.msra.mxu0 0.0
    %133 = vmatprep.subr.mxu0 0.0
    %134 = vmatpush1.msra.mxu0 0.0
    %135 = vmatprep.subr.mxu0 0.0
    %136 = vmatpush1.msra.mxu0 0.0
    %137 = vmatprep.subr.mxu0 0.0
    %138 = vmatpush1.msra.mxu0 0.0
    %139 = vmatprep.subr.mxu0 0.0
    %140 = vmatpush1.msra.mxu0 0.0
    %141 = vmatprep.subr.mxu0 0.0
    %142 = vmatpush1.msra.mxu0 0.0
    %143 = vmatprep.subr.mxu0 0.0
    %144 = vmatpush1.msra.mxu0 0.0
    %145 = vmatprep.subr.mxu0 0.0
    %146 = vmatpush1.msra.mxu0 0.0
    %147 = vmatprep.mubr.f32.mxu0 0.0
    %148 = vmatmul.mubr.f32.gmra.mrb[0].mxu0 %v59
    %v149 = vpop.f32.mrb[0].mxu0
    %v150 = vadd.f32 %v81, %v149
    %v151 = vpop.f32.mrb[0].mxu0
    %152 = vdwg.mxu0
    %v153 = vmax.f32 %v150, 0.0
    %154 = vst [vmem:[#allocation2] sm:$0xff] %v153
    // Predicated region
    $region22: #{true_transformer_forward.1} parent=1 // pred_check
      _
    $region23: #{true_transformer_forward.1} parent=1 // pred_check_branch
      %156 = sbr.rel (0) target = $region25
    $region24: #{true_transformer_forward.1} parent=1 // pred_region
      %s158 = ssub.s32 128, 128
      %159 = vsyncadd [#allocation3], %s158
      %s161 = sshll.u32 [#allocation2], 4
      %s162 = int_to_ptr.vmem [resolvable:$true] %s161
      %164 = dma.vmem_to_hbm [thread:$0]  %s162, 128, %s5, [#allocation3]
    $region25: #{true_transformer_forward.1} parent=1 // pred_fallthru
      _
    // Predicated region
    $region26: #{true_transformer_forward.1} parent=1 // pred_check
      _
    $region27: #{true_transformer_forward.1} parent=1 // pred_check_branch
      %166 = sbr.rel (0) target = $region29
    $region28: #{true_transformer_forward.1} parent=1 // pred_region
      %167 = dma.done [#allocation3], 128
    $region29: #{true_transformer_forward.1} parent=1 // pred_fallthru
      _
    %168 = vsyncpa [#allocation3], 1

</llo_original>
